<compile_context>
chip_gen: v6e
topology: v6e:2x2x1
jax: 0.10.0
libtpu: 0.0.40
codegen_flags: <defaults>
</compile_context>

<pallas_src>
import functools

import jax
import jax.numpy as jnp
from jax.experimental import pallas as pl
from jax.experimental.pallas import tpu as pltpu


def _mul_kernel(x_ref, o_ref, *, value):
    # `value` is a Python constant baked into the kernel body at trace time.
    o_ref[...] = (x_ref[...] * value).astype(o_ref.dtype)


def _sublane_granule(itemsize: int) -> int:
    # Sub-32-bit dtypes pack along sublanes: f32 vreg = 8x128, bf16 = 16x128,
    # int8/fp8 = 32x128. Keep row counts a multiple of the native granule.
    return max(8, 32 // itemsize)


def _target_block_bytes() -> int:
    # v7x (64 MiB VMEM, ~3.2 TB/s HBM): bigger blocks to amortize the fixed
    # ~0.35 us per-grid-step overhead.  v5e/v6e (128 MiB VMEM, lower BW):
    # 2 MiB already hides it and respects v5e's 16 MiB scoped-VMEM default.
    try:
        info = pltpu.get_tpu_info()
        vmem = getattr(info, "vmem_capacity_bytes", None)
        if vmem is not None and vmem <= (64 << 20):
            return 4 << 20
    except Exception:
        pass
    return 2 << 20


def _choose_layout(total: int, in_itemsize: int, out_itemsize: int):
    """Pick a lane-dense 2-D view (rows, cols) and block row count.

    cols: wide multiple of 128 (unmasked wide vst + long contiguous DMA bursts)
    rows: multiple of the dtype's sublane granule, so every block tiles exactly.
    Returns None if no clean aligned factorization exists.
    """
    itemsize = max(in_itemsize, out_itemsize)
    granule = max(_sublane_granule(in_itemsize), _sublane_granule(out_itemsize))

    cols = None
    for c in (4096, 2048, 1024, 512, 256, 128):
        if total % (granule * c) == 0:
            cols = c
            break
    if cols is None:
        return None
    rows = total // cols  # guaranteed multiple of `granule`

    target_bytes = _target_block_bytes()
    block_rows = max(granule, (target_bytes // (cols * itemsize)) // granule * granule)
    block_rows = min(block_rows, rows)

    # Guarantee >=2 grid steps when possible so "parallel" can shard the grid
    # across v7x's two TensorCores (single-step grids leave one TC idle).
    if block_rows >= rows and rows >= 2 * granule:
        block_rows = (rows // 2) // granule * granule

    while rows % block_rows:  # rows % granule == 0, so this terminates
        block_rows -= granule
    return rows, cols, block_rows


def multiply_module(x: jax.Array, value: float, *,
                    small_input_bypass_bytes: int = 256 << 10,
                    donate_input: bool = False) -> jax.Array:
    """Elementwise multiply by a fixed scalar (MultiplyModule.forward)."""
    # Output dtype follows JAX promotion of `x * value` so the kernel path,
    # the ragged fallback and the small-input bypass are all dtype-consistent
    # (integer x with a float multiplier promotes to float, like torch.mul).
    out_dtype = jax.eval_shape(
        lambda a: a * value, jax.ShapeDtypeStruct(x.shape, x.dtype)).dtype

    total = x.size
    in_itemsize = jnp.dtype(x.dtype).itemsize
    out_itemsize = jnp.dtype(out_dtype).itemsize

    # Tiny tensors: pallas_call launch + pipeline prologue/epilogue costs a few
    # us; let XLA fuse the multiply instead.
    if total * in_itemsize <= small_input_bypass_bytes:
        return x * value

    layout = _choose_layout(total, in_itemsize, out_itemsize)
    if layout is None:
        # Ragged size: pad/concat + final slice would add extra full HBM
        # passes around a memory-bound op — plain fused multiply is faster.
        return x * value

    rows, cols, block_rows = layout
    x2d = x.reshape(rows, cols)  # contiguous relayout, no data movement
    grid = (rows // block_rows,)

    alias = {0: 0} if (donate_input and x.dtype == out_dtype) else {}

    out2d = pl.pallas_call(
        functools.partial(_mul_kernel, value=value),
        out_shape=jax.ShapeDtypeStruct((rows, cols), out_dtype),
        grid_spec=pl.GridSpec(
            grid=grid,
            in_specs=[pl.BlockSpec((block_rows, cols), lambda i: (i, 0))],
            out_specs=pl.BlockSpec((block_rows, cols), lambda i: (i, 0)),
        ),
        compiler_params=pltpu.CompilerParams(
            dimension_semantics=("parallel",),  # 2-TC grid split on v7x
            vmem_limit_bytes=32 << 20,          # safe on every generation
        ),
        cost_estimate=pl.CostEstimate(
            flops=total,
            transcendentals=0,
            bytes_accessed=total * (in_itemsize + out_itemsize),
        ),
        input_output_aliases=alias,
    )(x2d)

    return out2d.reshape(x.shape)


if __name__ == "__main__":
    key = jax.random.PRNGKey(0)
    # NCHW input consistent with a conv-style module.
    x = jax.random.normal(key, (2, 4, 16, 16), dtype=jnp.float32)
    value = 0.125  # the module's fixed multiplier

    # Force the Pallas path (default bypass would route this 8 KiB tensor to
    # the fused-XLA fallback, which is what production callers want).
    y = jax.block_until_ready(multiply_module(x, value, small_input_bypass_bytes=0))
    ref = x * value
    assert y.shape == x.shape and y.dtype == ref.dtype
    assert jnp.allclose(y, ref, atol=1e-6, rtol=1e-6)

    # bf16 exercises the dtype-aware (16, 128) sublane granule path.
    xb = x.astype(jnp.bfloat16)
    yb = jax.block_until_ready(multiply_module(xb, value, small_input_bypass_bytes=0))
    refb = xb * value
    assert yb.dtype == refb.dtype
    assert jnp.allclose(yb.astype(jnp.float32), refb.astype(jnp.float32))

    print("KERNEL_OK")
</pallas_src>

<mosaic_0001>
module attributes {stable_mosaic.version = 11 : i64} {
  func.func @_mul_kernel(%arg0: i32, %arg1: memref<8x256xf32, #tpu.memory_space<vmem>>, %arg2: memref<8x256xf32, #tpu.memory_space<vmem>>) attributes {dimension_semantics = [#tpu.dimension_semantics<parallel>], iteration_bounds = array<i64: 1>, scalar_prefetch = 0 : i64, scratch_operands = 0 : i64, tpu.core_type = #tpu.core_type<tc>, window_params = [{transform_indices = @transform_0, window_bounds = array<i64: 8, 256>}, {transform_indices = @transform_1, window_bounds = array<i64: 8, 256>}]} {
    %c0 = arith.constant 0 : index
    %c0_0 = arith.constant 0 : index
    %0 = vector.load %arg1[%c0, %c0_0] : memref<8x256xf32, #tpu.memory_space<vmem>>, vector<8x256xf32>
    %cst = arith.constant 1.250000e-01 : f32
    %1 = vector.broadcast %cst : f32 to vector<8x256xf32>
    %2 = arith.mulf %0, %1 : vector<8x256xf32>
    %c0_1 = arith.constant 0 : index
    %c0_2 = arith.constant 0 : index
    %3 = vector.load %arg2[%c0_1, %c0_2] : memref<8x256xf32, #tpu.memory_space<vmem>>, vector<8x256xf32>
    tpu.vector_store %arg2[%c0_1, %c0_2], %2 {strides = array<i32>} : memref<8x256xf32, #tpu.memory_space<vmem>>, vector<8x256xf32>,
    return
  }
  func.func @transform_0(%arg0: i32) -> (i32, i32) {
    %c0_i32 = arith.constant 0 : i32
    %c0_i32_0 = arith.constant 0 : i32
    return %arg0, %c0_i32 : i32, i32
  }
  func.func @transform_1(%arg0: i32) -> (i32, i32) {
    %c0_i32 = arith.constant 0 : i32
    %c0_i32_0 = arith.constant 0 : i32
    return %arg0, %c0_i32 : i32, i32
  }
}

</mosaic_0001>

<llo_original>
// kernel: tpu_custom_call.1
$region0: #{tpu_custom_call.1}
  #allocation0 [shape = 'u32[]', space=smem, size = 0x4, offset = 0x4, fixed_abs, tag = 'smem constant byte address 0x4 - core index']
  #allocation1 [shape = 'u32[144,128]{1,0:T(1,128)}', space=vmem, size = 0x12000, scoped, tag = 'internal scratch']
  %s0 = inlined_call_operand.hbm [shape: f32[8,256], index: 0, kind: input, shape index: {}]
  %s1 = inlined_call_operand.hbm [shape: f32[8,256], index: 1, kind: output, shape index: {}]
  %s2 = sld [smem:[#allocation0]]
  $region18: #{tpu_custom_call.1} parent=0
    _
  %s4 = ssub.s32 1, %s2
  %s5 = scalar_select 0, %s4, %s2
  $region1: #{tpu_custom_call.1} parent=0
    #allocation2 [shape = 'u8[8192]{0}', space=vmem, size = 0x2000, scoped, tag = 'input window, operand 0, single buffered']
    #allocation3 [shape = 's32[1]{0}', space=sflag, size = 0x4, scoped, tag = 'scoped memory for tpu_custom_call.1']
    #allocation4 [shape = 's32[1]{0}', space=sflag, size = 0x4, scoped, tag = 'scoped memory for tpu_custom_call.1']
    #allocation5 [shape = 'u8[8192]{0}', space=vmem, size = 0x2000, scoped, tag = 'output window, operand 0, single buffered']
    %6 = vsyncpa [#allocation3], 0
    %7 = vsyncpa [#allocation4], 0
    // Predicated region
    $region2: #{tpu_custom_call.1} parent=1 // pred_check
      _
    $region3: #{tpu_custom_call.1} parent=1 // pred_check_branch
      %9 = sbr.rel (0) target = $region5
    $region4: #{tpu_custom_call.1} parent=1 // pred_region
      %s11 = ssub.s32 256, 256
      %12 = vsyncadd [#allocation3], %s11
      %s14 = sshll.u32 [#allocation2], 4
      %s15 = int_to_ptr.vmem [resolvable:$true] %s14
      %17 = dma.hbm_to_vmem [thread:$0]  %s0, 256, %s15, [#allocation3]
    $region5: #{tpu_custom_call.1} parent=1 // pred_fallthru
      _
    // Predicated region
    $region6: #{tpu_custom_call.1} parent=1 // pred_check
      _
    $region7: #{tpu_custom_call.1} parent=1 // pred_check_branch
      %19 = sbr.rel (0) target = $region9
    $region8: #{tpu_custom_call.1} parent=1 // pred_region
      %20 = dma.done [#allocation3], 256
    $region9: #{tpu_custom_call.1} parent=1 // pred_fallthru
      _
    %v21 = vld [vmem:[#allocation2] sm:$0xff]
    %v22 = vld [vmem:[#allocation2 + $0x8] sm:$0xff]
    %v23 = vmul.f32 %v21, 0.125
    %v24 = vmul.f32 %v22, 0.125
    %25 = vst [vmem:[#allocation5] sm:$0xff] %v23
    %26 = vst [vmem:[#allocation5 + $0x8] sm:$0xff] %v24
    // Predicated region
    $region10: #{tpu_custom_call.1} parent=1 // pred_check
      _
    $region11: #{tpu_custom_call.1} parent=1 // pred_check_branch
      %28 = sbr.rel (0) target = $region13
    $region12: #{tpu_custom_call.1} parent=1 // pred_region
      %s30 = ssub.s32 256, 256
      %31 = vsyncadd [#allocation4], %s30
      %s33 = sshll.u32 [#allocation5], 4
      %s34 = int_to_ptr.vmem [resolvable:$true] %s33
      %36 = dma.vmem_to_hbm [thread:$0]  %s34, 256, %s1, [#allocation4]
    $region13: #{tpu_custom_call.1} parent=1 // pred_fallthru
      _
    // Predicated region
    $region14: #{tpu_custom_call.1} parent=1 // pred_check
      _
    $region15: #{tpu_custom_call.1} parent=1 // pred_check_branch
      %38 = sbr.rel (0) target = $region17
    $region16: #{tpu_custom_call.1} parent=1 // pred_region
      %39 = dma.done [#allocation4], 256
    $region17: #{tpu_custom_call.1} parent=1 // pred_fallthru
      _
    %40 = vsyncpa [#allocation3], 1
    %41 = vsyncpa [#allocation4], 1

</llo_original>
